<compile_context>
chip_gen: v7x
topology: tpu7x:2x2x1
jax: 0.10.0
libtpu: 0.0.40
codegen_flags: <defaults>
</compile_context>

<pallas_src>
import functools
import math

import jax
import jax.numpy as jnp
from jax.experimental import pallas as pl
from jax.experimental.pallas import tpu as pltpu


# ----------------------------- kernels --------------------------------------


def _ce_kernel(dec_ref, lbl_ref, out_ref, m_acc, l_acc, g_acc, *, tv, v):
    """CE path, vocab-tiled online softmax. grid=(row, vocab), vocab='arbitrary'.

    Accumulators (VMEM scratch, (tn,1) f32): running max m, running sum l,
    gathered logit g.  Finalized on the last vocab step:
        loss = m + log(l) - g = logsumexp(x) - x[label].
    """
    k = pl.program_id(1)

    @pl.when(k == 0)
    def _():
        m_acc[...] = jnp.full_like(m_acc, -jnp.inf)
        l_acc[...] = jnp.zeros_like(l_acc)
        g_acc[...] = jnp.zeros_like(g_acc)

    x = dec_ref[...].astype(jnp.float32)                       # (tn, tv)
    tn = x.shape[0]
    col = jax.lax.broadcasted_iota(jnp.int32, (tn, tv), 1) + k * tv
    if v % tv != 0:                                            # mask ragged vocab tail
        x = jnp.where(col < v, x, -jnp.inf)

    # TODO(synk): fuse this gather with the exp-sum pass (explicit lane-chunk fori)
    # to drop one VMEM re-read of x on VPU/load-bound v7x.
    onehot = col == lbl_ref[...]
    g_acc[...] += jnp.sum(jnp.where(onehot, x, 0.0), axis=-1, keepdims=True)

    m_prev = m_acc[...]
    m_new = jnp.maximum(m_prev, jnp.max(x, axis=-1, keepdims=True))
    l_acc[...] = l_acc[...] * jnp.exp(m_prev - m_new) + jnp.sum(
        jnp.exp(x - m_new), axis=-1, keepdims=True)
    m_acc[...] = m_new

    @pl.when(k == pl.num_programs(1) - 1)
    def _():
        out_ref[...] = m_acc[...] + jnp.log(l_acc[...]) - g_acc[...]


def _lse_kernel(dec_ref, out_ref, m_acc, l_acc, *, tv, v):
    """Per-row logsumexp, vocab-tiled online softmax (pass 1 of the big-V KLD path)."""
    k = pl.program_id(1)

    @pl.when(k == 0)
    def _():
        m_acc[...] = jnp.full_like(m_acc, -jnp.inf)
        l_acc[...] = jnp.zeros_like(l_acc)

    x = dec_ref[...].astype(jnp.float32)
    tn = x.shape[0]
    if v % tv != 0:
        col = jax.lax.broadcasted_iota(jnp.int32, (tn, tv), 1) + k * tv
        x = jnp.where(col < v, x, -jnp.inf)

    m_prev = m_acc[...]
    m_new = jnp.maximum(m_prev, jnp.max(x, axis=-1, keepdims=True))
    l_acc[...] = l_acc[...] * jnp.exp(m_prev - m_new) + jnp.sum(
        jnp.exp(x - m_new), axis=-1, keepdims=True)
    m_acc[...] = m_new

    @pl.when(k == pl.num_programs(1) - 1)
    def _():
        out_ref[...] = m_acc[...] + jnp.log(l_acc[...])


def _kld_finalize_kernel(dec_ref, lbl_ref, lse_ref, out_ref, *, tv,
                         confidence, smooth_val, log_conf, log_smooth):
    """Elementwise pass 2 of the big-V KLD path: target * (log(target) - (x - lse))."""
    x = dec_ref[...].astype(jnp.float32)                       # (tn, tv)
    tn = x.shape[0]
    scores = x - lse_ref[...]
    col = jax.lax.broadcasted_iota(jnp.int32, (tn, tv), 1) + pl.program_id(1) * tv
    onehot = col == lbl_ref[...]
    target = jnp.where(onehot, confidence, smooth_val)
    log_target = jnp.where(onehot, log_conf, log_smooth)
    out_ref[...] = (target * (log_target - scores)).astype(out_ref.dtype)


def _kld_fused_kernel(dec_ref, lbl_ref, out_ref, *, confidence, smooth_val,
                      log_conf, log_smooth):
    """Single-pass KLD path when the whole vocab fits one block."""
    x = dec_ref[...].astype(jnp.float32)                       # (tn, V)
    tn, v = x.shape
    m = jnp.max(x, axis=-1, keepdims=True)
    lse = jnp.log(jnp.sum(jnp.exp(x - m), axis=-1, keepdims=True)) + m
    scores = x - lse
    col = jax.lax.broadcasted_iota(jnp.int32, (tn, v), 1)
    onehot = col == lbl_ref[...]
    target = jnp.where(onehot, confidence, smooth_val)
    log_target = jnp.where(onehot, log_conf, log_smooth)
    out_ref[...] = (target * (log_target - scores)).astype(out_ref.dtype)


# ----------------------------- tiling helpers --------------------------------


_TARGET_BLOCK_BYTES = 2 * 1024 * 1024    # ~2 MB blocks: already ~85% of HBM roofline
_MAX_TN = 1024
_MIN_ROW_STEPS = 4                       # keep pipelining + both v7x TCs busy


def _vmem_capacity_bytes():
    try:
        return int(pltpu.get_tpu_info().vmem_capacity_bytes)
    except Exception:
        return 64 * 1024 * 1024          # conservative (v7x per-TC VMEM)


def _round_up(x, m):
    return -(-x // m) * m


def _cdiv(a, b):
    return -(-a // b)


def _sublane_pack(dtype):
    return {4: 8, 2: 16, 1: 32}.get(jnp.dtype(dtype).itemsize, 8)


def _choose_tiles(n, v, in_bytes, pack, max_vocab_block):
    # Vocab chunk: full V if it fits one block, else a 128-lane multiple
    # (the ragged tail chunk is masked inside the kernel).
    if v <= max_vocab_block:
        tv = v
    else:
        tv = max((max_vocab_block // 128) * 128, 128)
    vt = _cdiv(v, tv)

    # Row tile: target ~2 MB input blocks, rounded to the sublane pack, and keep
    # at least ~_MIN_ROW_STEPS grid steps on the row axis whenever N allows
    # (never a degenerate 1-step grid that kills pipelining / megacore use).
    if n <= pack:
        tn = n
    else:
        tn = max(_TARGET_BLOCK_BYTES // max(tv * in_bytes, 1), pack)
        tn = min(tn, _MAX_TN)
        tn = min(tn, max(_round_up(_cdiv(n, _MIN_ROW_STEPS), pack), pack))
        tn = max((tn // pack) * pack, pack)
    nt = _cdiv(n, tn)
    return tn, nt, tv, vt


# ----------------------------- wrapper ---------------------------------------


def nmt_criterion(dec_outs, labels, *, label_smoothing=0.0, out_dtype=None,
                  max_vocab_block=8192):
    """JAX/Pallas equivalent of NMTCritierion(label_smoothing, reduction='none').forward.

    dec_outs: (N, V) logits (f32 or bf16, read at native width).
    labels:   (N,) integer class indices.
    out_dtype: dtype of the (N, V) KLD output (default f32 to match PyTorch;
               bf16 halves the dominant writeback traffic). Ignored for CE.
    """
    dec_outs = jnp.asarray(dec_outs)
    if dec_outs.dtype not in (jnp.float32, jnp.bfloat16):
        dec_outs = dec_outs.astype(jnp.float32)
    assert dec_outs.ndim == 2, "expected (N, V) logits"
    n, v = dec_outs.shape
    labels = jnp.asarray(labels, jnp.int32).reshape(-1)
    assert labels.shape[0] == n
    lbl2d = labels.reshape(n, 1)

    smoothing = label_smoothing > 0
    out_dtype = jnp.dtype(out_dtype) if out_dtype is not None else jnp.dtype(jnp.float32)

    in_bytes = jnp.dtype(dec_outs.dtype).itemsize
    pack = _sublane_pack(dec_outs.dtype)
    tn, nt, tv, vt = _choose_tiles(n, v, in_bytes, pack, max_vocab_block)

    out_blk_bytes = tn * (tv * out_dtype.itemsize if smoothing else 4)
    needed = 2 * tn * tv * in_bytes + 2 * out_blk_bytes + 8 * tn * 4
    vmem_limit = int(min(_vmem_capacity_bytes(),
                         max(16 * 1024 * 1024, needed + (4 << 20))))

    dec_spec = pl.BlockSpec((tn, tv), lambda i, k: (i, k))
    lbl_spec = pl.BlockSpec((tn, 1), lambda i, k: (i, 0))
    row_spec = pl.BlockSpec((tn, 1), lambda i, k: (i, 0))

    if not smoothing:
        # CrossEntropyLoss(reduction='none') -> (N,)
        cost = pl.CostEstimate(flops=6 * n * v, transcendentals=n * v,
                               bytes_accessed=n * v * in_bytes + 8 * n)
        out = pl.pallas_call(
            functools.partial(_ce_kernel, tv=tv, v=v),
            out_shape=jax.ShapeDtypeStruct((n, 1), jnp.float32),
            grid=(nt, vt),
            in_specs=[dec_spec, lbl_spec],
            out_specs=row_spec,
            scratch_shapes=[pltpu.VMEM((tn, 1), jnp.float32)] * 3,
            compiler_params=pltpu.CompilerParams(
                dimension_semantics=("parallel", "arbitrary"),
                vmem_limit_bytes=vmem_limit),
            cost_estimate=cost,
        )(dec_outs, lbl2d)
        return out.reshape(n)

    # KLDivLoss(reduction='none') -> (N, V)
    if v < 2:
        raise ValueError("label smoothing requires vocab size >= 2")
    confidence = 1.0 - label_smoothing
    smooth_val = label_smoothing / (v - 1)
    # xlogy-style handling: if confidence == 0 the smoothed target is 0 there and
    # the loss term is 0, so any finite stand-in for log(0) is fine.
    log_conf = math.log(confidence) if confidence > 0.0 else 0.0
    consts = dict(confidence=float(confidence), smooth_val=float(smooth_val),
                  log_conf=float(log_conf), log_smooth=float(math.log(smooth_val)))

    if vt == 1:
        # Whole vocab fits one block: single fused pass.
        cost = pl.CostEstimate(
            flops=8 * n * v, transcendentals=n * v,
            bytes_accessed=n * v * (in_bytes + out_dtype.itemsize) + 4 * n)
        return pl.pallas_call(
            functools.partial(_kld_fused_kernel, **consts),
            out_shape=jax.ShapeDtypeStruct((n, v), out_dtype),
            grid=(nt,),
            in_specs=[pl.BlockSpec((tn, v), lambda i: (i, 0)),
                      pl.BlockSpec((tn, 1), lambda i: (i, 0))],
            out_specs=pl.BlockSpec((tn, v), lambda i: (i, 0)),
            compiler_params=pltpu.CompilerParams(
                dimension_semantics=("parallel",),
                vmem_limit_bytes=vmem_limit),
            cost_estimate=cost,
        )(dec_outs, lbl2d)

    # Large vocab: pass 1 computes per-row LSE online, pass 2 streams the (N,V) output.
    lse = pl.pallas_call(
        functools.partial(_lse_kernel, tv=tv, v=v),
        out_shape=jax.ShapeDtypeStruct((n, 1), jnp.float32),
        grid=(nt, vt),
        in_specs=[dec_spec],
        out_specs=row_spec,
        scratch_shapes=[pltpu.VMEM((tn, 1), jnp.float32)] * 2,
        compiler_params=pltpu.CompilerParams(
            dimension_semantics=("parallel", "arbitrary"),
            vmem_limit_bytes=vmem_limit),
        cost_estimate=pl.CostEstimate(flops=4 * n * v, transcendentals=n * v,
                                      bytes_accessed=n * v * in_bytes + 4 * n),
    )(dec_outs)

    cost = pl.CostEstimate(
        flops=6 * n * v, transcendentals=0,
        bytes_accessed=n * v * (in_bytes + out_dtype.itemsize) + 8 * n)
    return pl.pallas_call(
        functools.partial(_kld_finalize_kernel, tv=tv, **consts),
        out_shape=jax.ShapeDtypeStruct((n, v), out_dtype),
        grid=(nt, vt),
        in_specs=[dec_spec, lbl_spec, row_spec],
        out_specs=pl.BlockSpec((tn, tv), lambda i, k: (i, k)),
        compiler_params=pltpu.CompilerParams(
            dimension_semantics=("parallel", "parallel"),
            vmem_limit_bytes=vmem_limit),
        cost_estimate=cost,
    )(dec_outs, lbl2d, lse)


# ----------------------------- reference & test ------------------------------


def _reference(dec_outs, labels, label_smoothing):
    """Pure-JAX reference mirroring the PyTorch module."""
    dec_outs = jnp.asarray(dec_outs, jnp.float32)
    scores = jax.nn.log_softmax(dec_outs, axis=-1)
    n, v = dec_outs.shape
    if label_smoothing > 0:
        confidence = 1.0 - label_smoothing
        smooth_val = label_smoothing / (v - 1)
        tgt = jnp.full((n, v), smooth_val, jnp.float32)
        tgt = tgt.at[jnp.arange(n), labels].set(confidence)
        return tgt * (jnp.log(tgt) - scores)
    s2 = jax.nn.log_softmax(scores, axis=-1)   # module's (idempotent) double log-softmax
    return -s2[jnp.arange(n), labels]


if __name__ == "__main__":
    key = jax.random.PRNGKey(0)
    k1, k2, k3, k4 = jax.random.split(key, 4)

    batch, seq, vocab = 2, 8, 32
    n = batch * seq                                           # flattened tokens
    dec_outs = jax.random.normal(k1, (n, vocab), dtype=jnp.float32)
    labels = jax.random.randint(k2, (n,), 0, vocab, dtype=jnp.int32)

    # label_smoothing == 0 path (CrossEntropyLoss, reduction='none')
    loss_ce = nmt_criterion(dec_outs, labels, label_smoothing=0.0)
    jax.block_until_ready(loss_ce)
    ref_ce = _reference(dec_outs, labels, 0.0)
    assert loss_ce.shape == (n,)
    assert jnp.allclose(loss_ce, ref_ce, atol=1e-5, rtol=1e-5)

    # label_smoothing > 0 path (KLDivLoss, reduction='none'), single vocab block
    loss_kl = nmt_criterion(dec_outs, labels, label_smoothing=0.1)
    jax.block_until_ready(loss_kl)
    ref_kl = _reference(dec_outs, labels, 0.1)
    assert loss_kl.shape == (n, vocab)
    assert jnp.allclose(loss_kl, ref_kl, atol=1e-5, rtol=1e-5)

    # bf16 logits accepted at native width (halved HBM reads)
    loss_bf16 = nmt_criterion(dec_outs.astype(jnp.bfloat16), labels, label_smoothing=0.0)
    jax.block_until_ready(loss_bf16)
    assert jnp.allclose(loss_bf16, ref_ce, atol=1e-1, rtol=5e-2)

    # optional bf16 (N,V) output on the KLD path (writeback traffic cut)
    loss_kl_bf16 = nmt_criterion(dec_outs, labels, label_smoothing=0.1,
                                 out_dtype=jnp.bfloat16)
    jax.block_until_ready(loss_kl_bf16)
    assert loss_kl_bf16.dtype == jnp.bfloat16
    assert jnp.allclose(loss_kl_bf16.astype(jnp.float32), ref_kl, atol=2e-2, rtol=5e-2)

    # ragged N (not a multiple of the row tile) -> partial-block masking, no jnp.pad
    n2 = 10
    loss_rag = nmt_criterion(dec_outs[:n2], labels[:n2], label_smoothing=0.0)
    jax.block_until_ready(loss_rag)
    assert loss_rag.shape == (n2,)
    assert jnp.allclose(loss_rag, ref_ce[:n2], atol=1e-5, rtol=1e-5)

    # vocab-tiled (online-softmax) path: V=200 with 128-lane chunks (ragged vocab tail)
    v3 = 200
    dec3 = jax.random.normal(k3, (n, v3), dtype=jnp.float32)
    lbl3 = jax.random.randint(k4, (n,), 0, v3, dtype=jnp.int32)
    loss3_ce = nmt_criterion(dec3, lbl3, label_smoothing=0.0, max_vocab_block=128)
    loss3_kl = nmt_criterion(dec3, lbl3, label_smoothing=0.1, max_vocab_block=128)
    jax.block_until_ready((loss3_ce, loss3_kl))
    assert loss3_ce.shape == (n,) and loss3_kl.shape == (n, v3)
    assert jnp.allclose(loss3_ce, _reference(dec3, lbl3, 0.0), atol=1e-5, rtol=1e-5)
    assert jnp.allclose(loss3_kl, _reference(dec3, lbl3, 0.1), atol=1e-5, rtol=1e-5)

    print("KERNEL_OK")
</pallas_src>

<mosaic_0001>
module attributes {stable_mosaic.version = 11 : i64} {
  func.func @_ce_kernel(%arg0: i32, %arg1: i32, %arg2: memref<8x32xf32, #tpu.memory_space<vmem>>, %arg3: memref<8x1xi32, #tpu.memory_space<vmem>>, %arg4: memref<8x1xf32, #tpu.memory_space<vmem>>, %arg5: memref<8x1xf32, #tpu.memory_space<vmem>>, %arg6: memref<8x1xf32, #tpu.memory_space<vmem>>, %arg7: memref<8x1xf32, #tpu.memory_space<vmem>>) attributes {dimension_semantics = [#tpu.dimension_semantics<parallel>, #tpu.dimension_semantics<arbitrary>], iteration_bounds = array<i64: 2, 1>, scalar_prefetch = 0 : i64, scratch_operands = 3 : i64, tpu.core_type = #tpu.core_type<tc>, window_params = [{transform_indices = @transform_0, window_bounds = array<i64: 8, 32>}, {transform_indices = @transform_1, window_bounds = array<i64: 8, 1>}, {transform_indices = @transform_2, window_bounds = array<i64: 8, 1>}]} {
    %c0_i32 = arith.constant 0 : i32
    %0 = arith.cmpi eq, %arg1, %c0_i32 : i32
    %1 = arith.extui %0 : i1 to i32
    %c0_i32_0 = arith.constant 0 : i32
    %2 = arith.cmpi ne, %1, %c0_i32_0 : i32
    scf.if %2 {
      %cst_21 = arith.constant 0xFF800000 : f32
      %37 = vector.broadcast %cst_21 : f32 to vector<8x1xf32>
      %c0_22 = arith.constant 0 : index
      %c0_23 = arith.constant 0 : index
      %38 = vector.load %arg5[%c0_22, %c0_23] : memref<8x1xf32, #tpu.memory_space<vmem>>, vector<8x1xf32>
      tpu.vector_store %arg5[%c0_22, %c0_23], %37 {strides = array<i32>} : memref<8x1xf32, #tpu.memory_space<vmem>>, vector<8x1xf32>,
      %cst_24 = arith.constant 0.000000e+00 : f32
      %39 = vector.broadcast %cst_24 : f32 to vector<8x1xf32>
      %c0_25 = arith.constant 0 : index
      %c0_26 = arith.constant 0 : index
      %40 = vector.load %arg6[%c0_25, %c0_26] : memref<8x1xf32, #tpu.memory_space<vmem>>, vector<8x1xf32>
      tpu.vector_store %arg6[%c0_25, %c0_26], %39 {strides = array<i32>} : memref<8x1xf32, #tpu.memory_space<vmem>>, vector<8x1xf32>,
      %cst_27 = arith.constant 0.000000e+00 : f32
      %41 = vector.broadcast %cst_27 : f32 to vector<8x1xf32>
      %c0_28 = arith.constant 0 : index
      %c0_29 = arith.constant 0 : index
      %42 = vector.load %arg7[%c0_28, %c0_29] : memref<8x1xf32, #tpu.memory_space<vmem>>, vector<8x1xf32>
      tpu.vector_store %arg7[%c0_28, %c0_29], %41 {strides = array<i32>} : memref<8x1xf32, #tpu.memory_space<vmem>>, vector<8x1xf32>,
    } else {
    }
    %c0 = arith.constant 0 : index
    %c0_1 = arith.constant 0 : index
    %3 = vector.load %arg2[%c0, %c0_1] : memref<8x32xf32, #tpu.memory_space<vmem>>, vector<8x32xf32>
    %4 = tpu.iota {dimensions = array<i32: 1>} : vector<8x32xi32>
    %c32_i32 = arith.constant 32 : i32
    %5 = arith.muli %arg1, %c32_i32 : i32
    %6 = vector.broadcast %5 : i32 to vector<8x32xi32>
    %7 = arith.addi %4, %6 : vector<8x32xi32>
    %c0_2 = arith.constant 0 : index
    %c0_3 = arith.constant 0 : index
    %8 = vector.load %arg3[%c0_2, %c0_3] : memref<8x1xi32, #tpu.memory_space<vmem>>, vector<8x1xi32>
    %9 = vector.broadcast %8 : vector<8x1xi32> to vector<8x32xi32>
    %10 = arith.cmpi eq, %7, %9 : vector<8x32xi32>
    %c0_4 = arith.constant 0 : index
    %c0_5 = arith.constant 0 : index
    %11 = vector.load %arg7[%c0_4, %c0_5] : memref<8x1xf32, #tpu.memory_space<vmem>>, vector<8x1xf32>
    %cst = arith.constant 0.000000e+00 : f32
    %12 = vector.broadcast %cst : f32 to vector<8x32xf32>
    %13 = arith.select %10, %3, %12 : vector<8x32xi1>, vector<8x32xf32>
    %cst_6 = arith.constant dense<0.000000e+00> : vector<8xf32>
    %14 = vector.multi_reduction <add>, %13, %cst_6 [1] : vector<8x32xf32> to vector<8xf32>
    %15 = vector.shape_cast %14 : vector<8xf32> to vector<8x1xf32>
    %16 = arith.addf %11, %15 : vector<8x1xf32>
    %c0_7 = arith.constant 0 : index
    %c0_8 = arith.constant 0 : index
    %17 = vector.load %arg7[%c0_7, %c0_8] : memref<8x1xf32, #tpu.memory_space<vmem>>, vector<8x1xf32>
    tpu.vector_store %arg7[%c0_7, %c0_8], %16 {strides = array<i32>} : memref<8x1xf32, #tpu.memory_space<vmem>>, vector<8x1xf32>,
    %c0_9 = arith.constant 0 : index
    %c0_10 = arith.constant 0 : index
    %18 = vector.load %arg5[%c0_9, %c0_10] : memref<8x1xf32, #tpu.memory_space<vmem>>, vector<8x1xf32>
    %cst_11 = arith.constant dense<0xFF800000> : vector<8xf32>
    %19 = vector.multi_reduction <maximumf>, %3, %cst_11 [1] : vector<8x32xf32> to vector<8xf32>
    %20 = vector.shape_cast %19 : vector<8xf32> to vector<8x1xf32>
    %21 = arith.maximumf %18, %20 : vector<8x1xf32>
    %c0_12 = arith.constant 0 : index
    %c0_13 = arith.constant 0 : index
    %22 = vector.load %arg6[%c0_12, %c0_13] : memref<8x1xf32, #tpu.memory_space<vmem>>, vector<8x1xf32>
    %23 = arith.subf %18, %21 : vector<8x1xf32>
    %24 = math.exp %23 : vector<8x1xf32>
    %25 = arith.mulf %22, %24 : vector<8x1xf32>
    %26 = vector.broadcast %21 : vector<8x1xf32> to vector<8x32xf32>
    %27 = arith.subf %3, %26 : vector<8x32xf32>
    %28 = math.exp %27 : vector<8x32xf32>
    %cst_14 = arith.constant dense<0.000000e+00> : vector<8xf32>
    %29 = vector.multi_reduction <add>, %28, %cst_14 [1] : vector<8x32xf32> to vector<8xf32>
    %30 = vector.shape_cast %29 : vector<8xf32> to vector<8x1xf32>
    %31 = arith.addf %25, %30 : vector<8x1xf32>
    %c0_15 = arith.constant 0 : index
    %c0_16 = arith.constant 0 : index
    %32 = vector.load %arg6[%c0_15, %c0_16] : memref<8x1xf32, #tpu.memory_space<vmem>>, vector<8x1xf32>
    tpu.vector_store %arg6[%c0_15, %c0_16], %31 {strides = array<i32>} : memref<8x1xf32, #tpu.memory_space<vmem>>, vector<8x1xf32>,
    %c0_17 = arith.constant 0 : index
    %c0_18 = arith.constant 0 : index
    %33 = vector.load %arg5[%c0_17, %c0_18] : memref<8x1xf32, #tpu.memory_space<vmem>>, vector<8x1xf32>
    tpu.vector_store %arg5[%c0_17, %c0_18], %21 {strides = array<i32>} : memref<8x1xf32, #tpu.memory_space<vmem>>, vector<8x1xf32>,
    %c0_i32_19 = arith.constant 0 : i32
    %34 = arith.cmpi eq, %arg1, %c0_i32_19 : i32
    %35 = arith.extui %34 : i1 to i32
    %c0_i32_20 = arith.constant 0 : i32
    %36 = arith.cmpi ne, %35, %c0_i32_20 : i32
    scf.if %36 {
      %c0_21 = arith.constant 0 : index
      %c0_22 = arith.constant 0 : index
      %37 = vector.load %arg5[%c0_21, %c0_22] : memref<8x1xf32, #tpu.memory_space<vmem>>, vector<8x1xf32>
      %c0_23 = arith.constant 0 : index
      %c0_24 = arith.constant 0 : index
      %38 = vector.load %arg6[%c0_23, %c0_24] : memref<8x1xf32, #tpu.memory_space<vmem>>, vector<8x1xf32>
      %39 = math.log %38 : vector<8x1xf32>
      %40 = arith.addf %37, %39 : vector<8x1xf32>
      %c0_25 = arith.constant 0 : index
      %c0_26 = arith.constant 0 : index
      %41 = vector.load %arg7[%c0_25, %c0_26] : memref<8x1xf32, #tpu.memory_space<vmem>>, vector<8x1xf32>
      %42 = arith.subf %40, %41 : vector<8x1xf32>
      %c0_27 = arith.constant 0 : index
      %c0_28 = arith.constant 0 : index
      %43 = vector.load %arg4[%c0_27, %c0_28] : memref<8x1xf32, #tpu.memory_space<vmem>>, vector<8x1xf32>
      tpu.vector_store %arg4[%c0_27, %c0_28], %42 {strides = array<i32>} : memref<8x1xf32, #tpu.memory_space<vmem>>, vector<8x1xf32>,
    } else {
    }
    return
  }
  func.func @transform_0(%arg0: i32, %arg1: i32) -> (i32, i32) {
    %c0_i32 = arith.constant 0 : i32
    return %arg0, %arg1 : i32, i32
  }
  func.func @transform_1(%arg0: i32, %arg1: i32) -> (i32, i32) {
    %c0_i32 = arith.constant 0 : i32
    %c0_i32_0 = arith.constant 0 : i32
    return %arg0, %c0_i32 : i32, i32
  }
  func.func @transform_2(%arg0: i32, %arg1: i32) -> (i32, i32) {
    %c0_i32 = arith.constant 0 : i32
    %c0_i32_0 = arith.constant 0 : i32
    return %arg0, %c0_i32 : i32, i32
  }
}

</mosaic_0001>

<llo_original>
// kernel: tpu_custom_call.1
$region0: #{tpu_custom_call.1}
  #allocation0 [shape = 'u32[]', space=smem, size = 0x4, offset = 0x4, fixed_abs, tag = 'smem constant byte address 0x4 - core index']
  #allocation1 [shape = 'u32[144,128]{1,0:T(1,128)}', space=vmem, size = 0x12000, scoped, tag = 'internal scratch']
  #allocation2 [shape = 'f32[8,1]{1,0:T(8,128)}', space=vmem, size = 0x1000, scoped, tag = 'scratch operand']
  #allocation3 [shape = 'f32[8,1]{1,0:T(8,128)}', space=vmem, size = 0x1000, scoped, tag = 'scratch operand']
  #allocation4 [shape = 'f32[8,1]{1,0:T(8,128)}', space=vmem, size = 0x1000, scoped, tag = 'scratch operand']
  %s0 = inlined_call_operand.vmem [shape: f32[16,32], index: 0, kind: input, shape index: {}]
  %s1 = inlined_call_operand.vmem [shape: s32[16,1], index: 1, kind: input, shape index: {}]
  %s2 = inlined_call_operand.vmem [shape: f32[16,1], index: 2, kind: output, shape index: {}]
  %s3 = sld [smem:[#allocation0]]
  $region49: #{tpu_custom_call.1} parent=0
    _
  %s5 = ssub.s32 1, %s3
  %s6 = scalar_select 0, %s5, %s3
  loop: start=0, step=1, limit=4
  $region2: #{tpu_custom_call.1} parent=0 // loop_pre_header
    _
  $region3: #{tpu_custom_call.1} parent=0 // loop_header
    %s8 = sphi 0, %s12
    %p9 = scmp.ge.s32.totalorder %s8, 4
    %s15 = sphi 0, %s27
    %s16 = sphi 0, %s23
    %s17 = sphi 0, %s15
    %s18 = sphi 0, %s16
    %s19 = sphi 0, %s17
    %s20 = sphi 0, %s18
    %s32 = sphi 0, %s34
    %s35 = sphi 0, %s32
    %s36 = sphi 0, %s35
    %s52 = sphi 0, %s36
    %s58 = sphi 0, %s60
    %s61 = sphi 0, %s58
    %s62 = sphi 0, %s61
    %s78 = sphi 0, %s62
    %s84 = sphi 0, %s86
    %s87 = sphi 0, %s84
    %s88 = sphi 0, %s87
    %s104 = sphi 0, %s88
  $region4: #{tpu_custom_call.1} parent=0 // loop_header_branch
    %11 = sbr.rel (%p9) target = $region8
  $region5: #{tpu_custom_call.1} parent=0 // loop_body
    %s13 = ssub.s32 %s8, 1
    %s14 = ssub.s32 %s8, 2
    %s21 = sadd.s32 1, %s16
    %p22 = scmp.ge.s32.totalorder %s21, 1
    %s23 = scalar_select %p22, 0, %s21
    %s24 = sadd.s32 1, %s15
    %s25 = scalar_select %p22, %s24, %s15
    %p26 = scmp.ge.s32.totalorder %s25, 2
    %s27 = scalar_select %p26, 0, %s25
    %s28 = ssub.s32 %s15, %s27
    %s29 = ssub.s32 %s16, %s23
    %s30 = sor.u32 %s28, %s29
    %p31 = scmp.eq.s32.totalorder %s30, 0
    %s33 = sadd.s32 %s32, 1
    %s34 = scalar_select %p31, %s32, %s33
    %p37 = pneg %p31
    %p38 = scmp.eq.s32.totalorder %s8, 1
    %p39 = por %p37, %p38
    %p40 = scmp.ne.s32.totalorder %s32, %s35
    %p41 = scmp.eq.s32.totalorder %s8, 0
    %p42 = por %p40, %p41
    %p43 = scmp.ne.s32.totalorder %s32, %s35
    %p44 = scmp.eq.s32.totalorder %s13, 1
    %p45 = por %p43, %p44
    %p46 = scmp.ne.s32.totalorder %s35, %s36
    %p47 = scmp.eq.s32.totalorder %s13, 0
    %p48 = por %p46, %p47
    %p49 = scmp.ne.s32.totalorder %s35, %s36
    %p50 = scmp.eq.s32.totalorder %s14, 1
    %p51 = por %p49, %p50
    %p53 = scmp.ne.s32.totalorder %s36, %s52
    %p54 = scmp.eq.s32.totalorder %s14, 0
    %p55 = por %p53, %p54
    %s56 = ssub.s32 %s15, %s27
    %p57 = scmp.eq.s32.totalorder %s56, 0
    %s59 = sadd.s32 %s58, 1
    %s60 = scalar_select %p57, %s58, %s59
    %p63 = pneg %p57
    %p64 = scmp.eq.s32.totalorder %s8, 1
    %p65 = por %p63, %p64
    %p66 = scmp.ne.s32.totalorder %s58, %s61
    %p67 = scmp.eq.s32.totalorder %s8, 0
    %p68 = por %p66, %p67
    %p69 = scmp.ne.s32.totalorder %s58, %s61
    %p70 = scmp.eq.s32.totalorder %s13, 1
    %p71 = por %p69, %p70
    %p72 = scmp.ne.s32.totalorder %s61, %s62
    %p73 = scmp.eq.s32.totalorder %s13, 0
    %p74 = por %p72, %p73
    %p75 = scmp.ne.s32.totalorder %s61, %s62
    %p76 = scmp.eq.s32.totalorder %s14, 1
    %p77 = por %p75, %p76
    %p79 = scmp.ne.s32.totalorder %s62, %s78
    %p80 = scmp.eq.s32.totalorder %s14, 0
    %p81 = por %p79, %p80
    %s82 = ssub.s32 %s15, %s27
    %p83 = scmp.eq.s32.totalorder %s82, 0
    %s85 = sadd.s32 %s84, 1
    %s86 = scalar_select %p83, %s84, %s85
    %p89 = pneg %p83
    %p90 = scmp.eq.s32.totalorder %s8, 1
    %p91 = por %p89, %p90
    %p92 = scmp.ne.s32.totalorder %s84, %s87
    %p93 = scmp.eq.s32.totalorder %s8, 0
    %p94 = por %p92, %p93
    %p95 = scmp.ne.s32.totalorder %s84, %s87
    %p96 = scmp.eq.s32.totalorder %s13, 1
    %p97 = por %p95, %p96
    %p98 = scmp.ne.s32.totalorder %s87, %s88
    %p99 = scmp.eq.s32.totalorder %s13, 0
    %p100 = por %p98, %p99
    %p101 = scmp.ne.s32.totalorder %s87, %s88
    %p102 = scmp.eq.s32.totalorder %s14, 1
    %p103 = por %p101, %p102
    %p105 = scmp.ne.s32.totalorder %s88, %s104
    %p106 = scmp.eq.s32.totalorder %s14, 0
    %p107 = por %p105, %p106
    %p108 = scmp.le.s32.totalorder 1, %s8
    %p109 = scmp.lt.s32.totalorder %s8, 3
    %p110 = pnand %p108, %p109
    %p111 = pneg %p110
    // Predicated region
    $region9: #{tpu_custom_call.1} parent=5 // pred_check
      _
    $region10: #{tpu_custom_call.1} parent=5 // pred_check_branch
      %113 = sbr.rel (%p110) target = $region12
    $region11: #{tpu_custom_call.1} parent=5 // pred_region
      %s114 = ssub.s32 %s8, 1
    $region12: #{tpu_custom_call.1} parent=5 // pred_fallthru
      _
    %p115 = scmp.lt.s32.totalorder %s8, 2
    // Predicated region
    $region13: #{tpu_custom_call.1} parent=5 // pred_check
      %p116 = pneg %p115
    $region14: #{tpu_custom_call.1} parent=5 // pred_check_branch
      %118 = sbr.rel (%p116) target = $region16
    $region15: #{tpu_custom_call.1} parent=5 // pred_region
      // Predicated region
      $region17: #{tpu_custom_call.1} parent=15 // pred_check
        %p119 = pneg %p42
      $region18: #{tpu_custom_call.1} parent=15 // pred_check_branch
        %121 = sbr.rel (%p119) target = $region20
      $region19: #{tpu_custom_call.1} parent=15 // pred_region
        %p122 = scmp.lt.s32.totalorder %s15, 1
        %s123 = scalar_select %p122, %s15, 1
        %p124 = scmp.lt.s32.totalorder %s16, 0
        %s125 = scalar_select %p124, %s16, 0
        %s126 = sadd.s32 %s125, %s123
        %s127 = smul.addr %s126, 8
        %s128 = scalar_lea.vmem %s0, %s127
      $region20: #{tpu_custom_call.1} parent=15 // pred_fallthru
        _
      // Predicated region
      $region21: #{tpu_custom_call.1} parent=15 // pred_check
        %p129 = pneg %p68
      $region22: #{tpu_custom_call.1} parent=15 // pred_check_branch
        %131 = sbr.rel (%p129) target = $region24
      $region23: #{tpu_custom_call.1} parent=15 // pred_region
        %p132 = scmp.lt.s32.totalorder %s15, 1
        %s133 = scalar_select %p132, %s15, 1
        %s134 = smul.addr %s133, 8
        %s135 = scalar_lea.vmem %s1, %s134
      $region24: #{tpu_custom_call.1} parent=15 // pred_fallthru
        _
    $region16: #{tpu_custom_call.1} parent=5 // pred_fallthru
      _
    %p136 = scmp.le.s32.totalorder 1, %s8
    %p137 = scmp.lt.s32.totalorder %s8, 3
    %p138 = pnand %p136, %p137
    %p139 = pneg %p138
    // Predicated region
    $region25: #{tpu_custom_call.1} parent=5 // pred_check
      _
    $region26: #{tpu_custom_call.1} parent=5 // pred_check_branch
      %141 = sbr.rel (%p138) target = $region28
    $region27: #{tpu_custom_call.1} parent=5 // pred_region
      %s142 = ssub.s32 %s8, 1
      %p143 = scmp.lt.s32.totalorder %s17, 1
      %s144 = scalar_select %p143, %s17, 1
      %p145 = scmp.lt.s32.totalorder %s18, 0
      %s146 = scalar_select %p145, %s18, 0
      %s147 = sadd.s32 %s146, %s144
      %s148 = smul.addr %s147, 8
      %s149 = scalar_lea.vmem %s0, %s148
      %p150 = pneg %p48
      %p151 = pneg %p45
      %p152 = scmp.lt.s32.totalorder %s17, 1
      %s153 = scalar_select %p152, %s17, 1
      %s154 = smul.addr %s153, 8
      %s155 = scalar_lea.vmem %s1, %s154
      %p156 = pneg %p74
      %p157 = pneg %p71
      %p158 = pneg %p100
      %p159 = pneg %p97
      %p160 = scmp.lt.s32.totalorder %s17, 1
      %s161 = scalar_select %p160, %s17, 1
      %s162 = smul.addr %s161, 8
      %s163 = scalar_lea.vmem %s2, %s162
      %p164 = scmp.lt.s32.totalorder %s17, 1
      %s165 = scalar_select %p164, %s17, 1
      %p166 = scmp.lt.s32.totalorder %s18, 0
      %s167 = scalar_select %p166, %s18, 0
      %s168 = sadd.s32 %s167, %s165
      %s169 = smul.addr %s168, 8
      %s170 = scalar_lea.vmem %s0, %s169
      %p171 = scmp.lt.s32.totalorder %s17, 1
      %s172 = scalar_select %p171, %s17, 1
      %s173 = smul.addr %s172, 8
      %s174 = scalar_lea.vmem %s1, %s173
      %p175 = scmp.lt.s32.totalorder %s17, 1
      %s176 = scalar_select %p175, %s17, 1
      %s177 = smul.addr %s176, 8
      %s178 = scalar_lea.vmem %s2, %s177
      %p179 = scmp.eq.s32.totalorder %s18, 0
      // Predicated region
      $region29: #{tpu_custom_call.1} parent=27 // pred_check
        %p180 = pneg %p179
      $region30: #{tpu_custom_call.1} parent=27 // pred_check_branch
        %182 = sbr.rel (%p180) target = $region32
      $region31: #{tpu_custom_call.1} parent=27 // pred_region
        %vm183 = vcmask 7168
        %184 = vst.msk [vmem:[#allocation2] sm:$0xff] %vm183, -inf
        %185 = vst.msk [vmem:[#allocation3] sm:$0xff] %vm183, 0.0
        %186 = vst.msk [vmem:[#allocation4] sm:$0xff] %vm183, 0.0
      $region32: #{tpu_custom_call.1} parent=27 // pred_fallthru
        _
      %v187 = vld [vmem:[%s170] sm:$0xff]
      %v188 = vlaneseq
      %v189 = vand.u32 %v188, 127
      %s190 = smul.u32 %s18, 32
      %v191 = vstv %s190
      %v192 = vadd.s32 %v189, %v191
      %v193 = vld [vmem:[%s174] sm:$0xff]
      %194 = vset.pattern.permute.xlu0 0
      %195 = vperm.xlu0 %194, %v193
      %v196 = vpop.permute.xlu0 %195
      %vm197 = vcmp.eq.s32.totalorder %v192, %v196
      %v198 = vld [vmem:[#allocation4] sm:$0xff]
      %v199 = vsel %vm197, %v187, 0.0
      %vm200 = vcmask 261120
      %v201 = vsel %vm200, %v199, 0.0
      %202 = vadd.xlane.f32.xlu0 %v201
      %v203 = vpop.xlane.xlu0 %202
      %v204 = vadd.f32 %v198, %v203
      %vm205 = vcmask 7168
      %206 = vst.msk [vmem:[#allocation4] sm:$0xff] %vm205, %v204
      %v207 = vld [vmem:[#allocation2] sm:$0xff]
      %v208 = vsel %vm200, %v187, -inf
      %209 = vmax.xlane.f32.xlu0 %v208
      %v210 = vpop.xlane.xlu0 %209
      %v211 = vmax.f32 %v207, %v210
      %v212 = vld [vmem:[#allocation3] sm:$0xff]
      %v213 = vsub.f32 %v207, %v211
      %v214 = vmul.f32 %v213, 1.442695
      %v215 = vpow.pop %v214
      %v216 = vmul.f32 %v212, %v215
      %218 = vset.pattern.permute.xlu0 0
      %219 = vperm.xlu0 %218, %v211
      %v220 = vpop.permute.xlu0 %219
      %v222 = vsub.f32 %v187, %v220
      %v223 = vmul.f32 %v222, 1.442695
      %v224 = vpow.pop %v223
      %v225 = vsel %vm200, %v224, 0.0
      %226 = vadd.xlane.f32.xlu0 %v225
      %v227 = vpop.xlane.xlu0 %226
      %v228 = vadd.f32 %v216, %v227
      %229 = vst.msk [vmem:[#allocation3] sm:$0xff] %vm205, %v228
      %230 = vst.msk [vmem:[#allocation2] sm:$0xff] %vm205, %v211
      // Predicated region
      $region33: #{tpu_custom_call.1} parent=27 // pred_check
        %p231 = pneg %p179
      $region34: #{tpu_custom_call.1} parent=27 // pred_check_branch
        %233 = sbr.rel (%p231) target = $region36
      $region35: #{tpu_custom_call.1} parent=27 // pred_region
        %v234 = vld [vmem:[#allocation2] sm:$0xff]
        %v235 = vld [vmem:[#allocation3] sm:$0xff]
        %v236 = vlog2.pop %v235
        %v237 = vmul.f32 %v236, 0.6931472
        %v238 = vadd.f32 %v234, %v237
        %v239 = vld [vmem:[#allocation4] sm:$0xff]
        %v240 = vsub.f32 %v238, %v239
        %241 = vst.msk [vmem:[%s178] sm:$0xff] %vm205, %v240
      $region36: #{tpu_custom_call.1} parent=27 // pred_fallthru
        _
      %p242 = scmp.lt.s32.totalorder %s17, 1
      %s243 = scalar_select %p242, %s17, 1
      %s244 = smul.addr %s243, 8
      %s245 = scalar_lea.vmem %s2, %s244
      // Predicated region
      $region37: #{tpu_custom_call.1} parent=27 // pred_check
        %p246 = pneg %p97
      $region38: #{tpu_custom_call.1} parent=27 // pred_check_branch
        %248 = sbr.rel (%p246) target = $region40
      $region39: #{tpu_custom_call.1} parent=27 // pred_region
        _
      $region40: #{tpu_custom_call.1} parent=27 // pred_fallthru
        _
    $region28: #{tpu_custom_call.1} parent=5 // pred_fallthru
      _
    %p249 = scmp.le.s32.totalorder 2, %s8
    // Predicated region
    $region41: #{tpu_custom_call.1} parent=5 // pred_check
      %p250 = pneg %p249
    $region42: #{tpu_custom_call.1} parent=5 // pred_check_branch
      %252 = sbr.rel (%p250) target = $region44
    $region43: #{tpu_custom_call.1} parent=5 // pred_region
      %s253 = ssub.s32 %s8, 2
      // Predicated region
      $region45: #{tpu_custom_call.1} parent=43 // pred_check
        %p254 = pneg %p103
      $region46: #{tpu_custom_call.1} parent=43 // pred_check_branch
        %256 = sbr.rel (%p254) target = $region48
      $region47: #{tpu_custom_call.1} parent=43 // pred_region
        %p257 = scmp.lt.s32.totalorder %s19, 1
        %s258 = scalar_select %p257, %s19, 1
        %s259 = smul.addr %s258, 8
        %s260 = scalar_lea.vmem %s2, %s259
      $region48: #{tpu_custom_call.1} parent=43 // pred_fallthru
        _
    $region44: #{tpu_custom_call.1} parent=5 // pred_fallthru
      _
  $region6: #{tpu_custom_call.1} parent=0 // loop_footer
    %s12 = sadd.s32 1, %s8
  $region7: #{tpu_custom_call.1} parent=0 // loop_footer_branch
    %7 = sbr.rel target = $region3
  $region8: #{tpu_custom_call.1} parent=0 // loop_exit
    _

</llo_original>
